<compile_context>
chip_gen: v7x
topology: tpu7x:2x2x1
jax: 0.10.0
libtpu: 0.0.40
codegen_flags: <defaults>
</compile_context>

<pallas_src>
import functools
from typing import NamedTuple, Optional

import jax
import jax.numpy as jnp
from jax.experimental import pallas as pl
from jax.experimental.pallas import tpu as pltpu


def _round_up(x: int, m: int) -> int:
    return ((x + m - 1) // m) * m


def _pick_tile(dim: int, max_tile: int, *, split: bool = False) -> int:
    """Tile size along one axis.

    Full-extent block when the dim fits (no padding; satisfies the (8,128)
    rule via "equals full dim"), otherwise a 128-aligned tile <= max_tile.
    split=True forces >=2 blocks (v7x megacore sharding) when dim > 128.
    """
    if dim <= 128:
        return dim
    if not split and dim <= max_tile:
        return dim
    t = min(max_tile, _round_up(dim, 128))
    if split:
        t = min(t, _round_up(-(-dim // 2), 128))
    return max(128, (t // 128) * 128)


def _linear_kernel(x_ref, w_ref, *rest, has_bias: bool, out_is_acc: bool):
    # x_ref: (tm, tk), w_ref: (tk, tn) (weight pre-transposed at load time),
    # optional b_ref: (1, tn), o_ref: (tm, tn),
    # optional acc_ref: (tm, tn) f32 scratch (only when output dtype != f32).
    idx = 0
    b_ref = None
    if has_bias:
        b_ref = rest[0]
        idx = 1
    o_ref = rest[idx]
    acc_ref = o_ref if out_is_acc else rest[idx + 1]

    k = pl.program_id(2)

    @pl.when(k == 0)
    def _init():
        acc_ref[...] = jnp.zeros_like(acc_ref)

    # Plain (M, K) x (K, N) contraction on the MXU, f32 accumulation.
    acc_ref[...] += jnp.dot(x_ref[...], w_ref[...],
                            preferred_element_type=jnp.float32)

    if has_bias or not out_is_acc:
        @pl.when(k == pl.num_programs(2) - 1)
        def _finalize():
            acc = acc_ref[...]
            if has_bias:
                acc = acc + b_ref[...].astype(jnp.float32)
            o_ref[...] = acc.astype(o_ref.dtype)


class LinearParams(NamedTuple):
    weight: jax.Array           # (K_pad, N_pad): transposed + padded (+ cast)
    bias: Optional[jax.Array]   # (1, N_pad) or None
    input_dim: int
    output_dim: int
    tn: int
    tk: int


def prepare_linear_params(weight, bias=None, *, tn=512, tk=1024,
                          compute_dtype=None) -> LinearParams:
    """One-time (model-load-time) weight preparation.

    Transposes W (out, in) -> (K, N), pads to tile multiples and optionally
    casts to a lower-precision compute dtype, so the per-call forward never
    touches the weight layout (saves a full HBM pass over W every call).
    """
    output_dim, input_dim = weight.shape
    tn_ = _pick_tile(output_dim, tn, split=output_dim > 128)
    tk_ = _pick_tile(input_dim, tk)
    n_p = _round_up(output_dim, tn_)
    k_p = _round_up(input_dim, tk_)

    w = weight.T                      # (K, N)
    if compute_dtype is not None:
        w = w.astype(compute_dtype)
    if (k_p, n_p) != (input_dim, output_dim):
        w = jnp.pad(w, ((0, k_p - input_dim), (0, n_p - output_dim)))

    b = None
    if bias is not None:
        b = bias.reshape(1, output_dim)
        if n_p != output_dim:
            b = jnp.pad(b, ((0, 0), (0, n_p - output_dim)))

    return LinearParams(weight=w, bias=b, input_dim=input_dim,
                        output_dim=output_dim, tn=tn_, tk=tk_)


@functools.partial(
    jax.jit,
    static_argnames=("output_dim", "tm", "tn", "tk", "input_buffers"))
def _linear_forward_impl(x, w, b, *, output_dim, tm, tn, tk, input_buffers):
    *batch_shape, input_dim = x.shape
    x2d = x.reshape((-1, input_dim))
    m = x2d.shape[0]
    k_p, n_p = w.shape

    # Compute in the prepared weight's dtype (e.g. bf16); output keeps the
    # original activation dtype, accumulation is always f32.
    out_dtype = x.dtype
    if x2d.dtype != w.dtype:
        x2d = x2d.astype(w.dtype)

    # M tile: split into >=2 blocks only when N has a single block, so both
    # v7x TensorCores stay busy in the small-output / large-batch regime.
    n_blocks = n_p // tn
    tm_ = _pick_tile(m, tm, split=(n_blocks == 1 and m > 128))
    m_p = _round_up(m, tm_)

    # Pad activations only (weight/bias padded once at load time).
    if (m_p, k_p) != (m, input_dim):
        x2d = jnp.pad(x2d, ((0, m_p - m), (0, k_p - input_dim)))

    grid = (m_p // tm_, n_p // tn, k_p // tk)
    has_bias = b is not None
    out_is_acc = out_dtype == jnp.float32   # accumulate directly into o_ref

    def _stream_spec(shape, index_map):
        if input_buffers > 2:
            return pl.BlockSpec(shape, index_map,
                                pipeline_mode=pl.Buffered(input_buffers))
        return pl.BlockSpec(shape, index_map)

    in_specs = [
        _stream_spec((tm_, tk), lambda i, j, k: (i, k)),   # x tile
        _stream_spec((tk, tn), lambda i, j, k: (k, j)),    # w tile (K, N)
    ]
    args = [x2d, w]
    if has_bias:
        in_specs.append(pl.BlockSpec((1, tn), lambda i, j, k: (0, j)))
        args.append(b)

    scratch_shapes = [] if out_is_acc else [pltpu.VMEM((tm_, tn), jnp.float32)]

    x_it = jnp.dtype(x2d.dtype).itemsize
    w_it = jnp.dtype(w.dtype).itemsize
    o_it = jnp.dtype(out_dtype).itemsize
    b_it = jnp.dtype(b.dtype).itemsize if has_bias else 0
    gi, gj, gk = grid

    # VMEM budget (multi-buffered x/w, double-buffered out/bias, + acc).
    bufs = max(2, input_buffers)
    vmem_need = (bufs * (tm_ * tk * x_it + tk * tn * w_it)
                 + 2 * (tm_ * tn * o_it + tn * b_it)
                 + (0 if out_is_acc else tm_ * tn * 4))
    vmem_limit = min(max(int(vmem_need * 1.5) + (2 << 20), 32 << 20), 100 << 20)

    # HBM traffic including cross-tile re-streaming (x re-read per N block,
    # w re-read per M block).
    cost = pl.CostEstimate(
        flops=2 * m_p * n_p * k_p,
        transcendentals=0,
        bytes_accessed=(m_p * k_p * x_it * gj
                        + k_p * n_p * w_it * gi
                        + n_p * b_it * gi
                        + m_p * n_p * o_it),
    )

    kernel = functools.partial(_linear_kernel, has_bias=has_bias,
                               out_is_acc=out_is_acc)

    out2d = pl.pallas_call(
        kernel,
        out_shape=jax.ShapeDtypeStruct((m_p, n_p), out_dtype),
        grid_spec=pltpu.PrefetchScalarGridSpec(
            num_scalar_prefetch=0,
            grid=grid,
            in_specs=in_specs,
            out_specs=pl.BlockSpec((tm_, tn), lambda i, j, k: (i, j)),
            scratch_shapes=scratch_shapes,
        ),
        compiler_params=pltpu.CompilerParams(
            dimension_semantics=("parallel", "parallel", "arbitrary"),
            vmem_limit_bytes=vmem_limit,
        ),
        cost_estimate=cost,
    )(*args)

    if (m_p, n_p) != (m, output_dim):
        out2d = out2d[:m, :output_dim]
    return out2d.reshape((*batch_shape, output_dim))


def linear_forward(x, params: LinearParams, *, tm=512, input_buffers=2):
    """y = x @ W^T + b (torch.nn.Linear semantics) using prepared params."""
    assert x.shape[-1] == params.input_dim, (x.shape, params.input_dim)
    return _linear_forward_impl(
        x, params.weight, params.bias,
        output_dim=params.output_dim, tm=tm, tn=params.tn, tk=params.tk,
        input_buffers=input_buffers)


def init_linear_params(key, input_dim, output_dim, dtype=jnp.float32):
    """Deterministic init matching torch.nn.Linear's reset_parameters bounds."""
    k_w, k_b = jax.random.split(key)
    bound = 1.0 / jnp.sqrt(jnp.asarray(input_dim, dtype=jnp.float32))
    weight = jax.random.uniform(
        k_w, (output_dim, input_dim), dtype=dtype, minval=-bound, maxval=bound)
    bias = jax.random.uniform(
        k_b, (output_dim,), dtype=dtype, minval=-bound, maxval=bound)
    return weight, bias


if __name__ == "__main__":
    key = jax.random.PRNGKey(0)
    k_x, k_p, k_x2, k_p2 = jax.random.split(key, 4)

    # 1) Small inference-style case: full-extent blocks, f32,
    #    accumulate-into-output (no scratch) path, fused bias.
    batch, input_dim, output_dim = 8, 32, 64
    x = jax.random.normal(k_x, (batch, input_dim), dtype=jnp.float32)
    weight, bias = init_linear_params(k_p, input_dim, output_dim)
    params = prepare_linear_params(weight, bias)

    y = linear_forward(x, params)
    jax.block_until_ready(y)
    y_ref = x @ weight.T + bias
    assert y.shape == (batch, output_dim)
    assert jnp.allclose(y, y_ref, atol=1e-5, rtol=1e-5)

    # 2) Tiled / padded / multi-K-step path with megacore N split, grid (2,2,2),
    #    forced small tiles so it is exercised at small shapes.
    m2, k2, n2 = 100, 160, 192
    x2 = jax.random.normal(k_x2, (2, m2, k2), dtype=jnp.float32)
    w2, b2 = init_linear_params(k_p2, k2, n2)
    params2 = prepare_linear_params(w2, b2, tn=128, tk=128)
    y2 = linear_forward(x2, params2, tm=128)
    jax.block_until_ready(y2)
    y2_ref = x2 @ w2.T + b2
    assert y2.shape == (2, m2, n2)
    assert jnp.allclose(y2, y2_ref, atol=1e-2, rtol=1e-2)

    # 3) bf16 compute (f32 accumulate), no-bias kernel variant, scratch
    #    accumulator path (non-f32 output).
    x3 = x.astype(jnp.bfloat16)
    params3 = prepare_linear_params(weight, None, compute_dtype=jnp.bfloat16)
    y3 = linear_forward(x3, params3)
    jax.block_until_ready(y3)
    y3_ref = (x3.astype(jnp.float32) @ weight.T).astype(jnp.bfloat16)
    assert y3.shape == (batch, output_dim)
    assert jnp.allclose(y3.astype(jnp.float32), y3_ref.astype(jnp.float32),
                        atol=5e-2, rtol=5e-2)

    print("KERNEL_OK")
</pallas_src>

<mosaic_0001>
module attributes {stable_mosaic.version = 11 : i64} {
  func.func @_linear_kernel(%arg0: i32, %arg1: i32, %arg2: i32, %arg3: memref<8x32xf32, #tpu.memory_space<vmem>>, %arg4: memref<32x64xf32, #tpu.memory_space<vmem>>, %arg5: memref<1x64xf32, #tpu.memory_space<vmem>>, %arg6: memref<8x64xf32, #tpu.memory_space<vmem>>) attributes {dimension_semantics = [#tpu.dimension_semantics<parallel>, #tpu.dimension_semantics<parallel>, #tpu.dimension_semantics<arbitrary>], iteration_bounds = array<i64: 1, 1, 1>, scalar_prefetch = 0 : i64, scratch_operands = 0 : i64, tpu.core_type = #tpu.core_type<tc>, window_params = [{transform_indices = @transform_0, window_bounds = array<i64: 8, 32>}, {transform_indices = @transform_1, window_bounds = array<i64: 32, 64>}, {transform_indices = @transform_2, window_bounds = array<i64: 1, 64>}, {transform_indices = @transform_3, window_bounds = array<i64: 8, 64>}]} {
    %c0_i32 = arith.constant 0 : i32
    %0 = arith.cmpi eq, %arg2, %c0_i32 : i32
    %1 = arith.extui %0 : i1 to i32
    %c0_i32_0 = arith.constant 0 : i32
    %2 = arith.cmpi ne, %1, %c0_i32_0 : i32
    scf.if %2 {
      %cst_10 = arith.constant 0.000000e+00 : f32
      %12 = vector.broadcast %cst_10 : f32 to vector<8x64xf32>
      %c0_11 = arith.constant 0 : index
      %c0_12 = arith.constant 0 : index
      %13 = vector.load %arg6[%c0_11, %c0_12] : memref<8x64xf32, #tpu.memory_space<vmem>>, vector<8x64xf32>
      tpu.vector_store %arg6[%c0_11, %c0_12], %12 {strides = array<i32>} : memref<8x64xf32, #tpu.memory_space<vmem>>, vector<8x64xf32>,
    } else {
    }
    %c0 = arith.constant 0 : index
    %c0_1 = arith.constant 0 : index
    %3 = vector.load %arg6[%c0, %c0_1] : memref<8x64xf32, #tpu.memory_space<vmem>>, vector<8x64xf32>
    %c0_2 = arith.constant 0 : index
    %c0_3 = arith.constant 0 : index
    %4 = vector.load %arg3[%c0_2, %c0_3] : memref<8x32xf32, #tpu.memory_space<vmem>>, vector<8x32xf32>
    %c0_4 = arith.constant 0 : index
    %c0_5 = arith.constant 0 : index
    %5 = vector.load %arg4[%c0_4, %c0_5] : memref<32x64xf32, #tpu.memory_space<vmem>>, vector<32x64xf32>
    %cst = arith.constant dense<0.000000e+00> : vector<8x64xf32>
    %6 = tpu.matmul %4, %5, %cst {dimension_numbers = #tpu.dot_dimension_numbers<[1], [0], [0], [1], [0, 0, 1, 1], [], []>} : vector<8x32xf32>, vector<32x64xf32>, vector<8x64xf32> -> vector<8x64xf32>
    %7 = arith.addf %3, %6 : vector<8x64xf32>
    %c0_6 = arith.constant 0 : index
    %c0_7 = arith.constant 0 : index
    %8 = vector.load %arg6[%c0_6, %c0_7] : memref<8x64xf32, #tpu.memory_space<vmem>>, vector<8x64xf32>
    tpu.vector_store %arg6[%c0_6, %c0_7], %7 {strides = array<i32>} : memref<8x64xf32, #tpu.memory_space<vmem>>, vector<8x64xf32>,
    %c0_i32_8 = arith.constant 0 : i32
    %9 = arith.cmpi eq, %arg2, %c0_i32_8 : i32
    %10 = arith.extui %9 : i1 to i32
    %c0_i32_9 = arith.constant 0 : i32
    %11 = arith.cmpi ne, %10, %c0_i32_9 : i32
    scf.if %11 {
      %c0_10 = arith.constant 0 : index
      %c0_11 = arith.constant 0 : index
      %12 = vector.load %arg6[%c0_10, %c0_11] : memref<8x64xf32, #tpu.memory_space<vmem>>, vector<8x64xf32>
      %c0_12 = arith.constant 0 : index
      %c0_13 = arith.constant 0 : index
      %13 = vector.load %arg5[%c0_12, %c0_13] : memref<1x64xf32, #tpu.memory_space<vmem>>, vector<1x64xf32>
      %14 = vector.broadcast %13 : vector<1x64xf32> to vector<8x64xf32>
      %15 = arith.addf %12, %14 : vector<8x64xf32>
      %c0_14 = arith.constant 0 : index
      %c0_15 = arith.constant 0 : index
      %16 = vector.load %arg6[%c0_14, %c0_15] : memref<8x64xf32, #tpu.memory_space<vmem>>, vector<8x64xf32>
      tpu.vector_store %arg6[%c0_14, %c0_15], %15 {strides = array<i32>} : memref<8x64xf32, #tpu.memory_space<vmem>>, vector<8x64xf32>,
    } else {
    }
    return
  }
  func.func @transform_0(%arg0: i32, %arg1: i32, %arg2: i32) -> (i32, i32) {
    %c0_i32 = arith.constant 0 : i32
    return %arg0, %arg2 : i32, i32
  }
  func.func @transform_1(%arg0: i32, %arg1: i32, %arg2: i32) -> (i32, i32) {
    %c0_i32 = arith.constant 0 : i32
    return %arg2, %arg1 : i32, i32
  }
  func.func @transform_2(%arg0: i32, %arg1: i32, %arg2: i32) -> (i32, i32) {
    %c0_i32 = arith.constant 0 : i32
    %c0_i32_0 = arith.constant 0 : i32
    return %c0_i32, %arg1 : i32, i32
  }
  func.func @transform_3(%arg0: i32, %arg1: i32, %arg2: i32) -> (i32, i32) {
    %c0_i32 = arith.constant 0 : i32
    return %arg0, %arg1 : i32, i32
  }
}

</mosaic_0001>

<llo_original>
// kernel: _linear_forward_impl.1
$region0: #{_linear_forward_impl.1}
  #allocation0 [shape = 'u32[]', space=smem, size = 0x4, offset = 0x4, fixed_abs, tag = 'smem constant byte address 0x4 - core index']
  #allocation1 [shape = 'u32[144,128]{1,0:T(1,128)}', space=vmem, size = 0x12000, scoped, tag = 'internal scratch']
  %s0 = inlined_call_operand.hbm [shape: f32[8,32], index: 0, kind: input, shape index: {}]
  %s1 = inlined_call_operand.hbm [shape: f32[32,64], index: 1, kind: input, shape index: {}]
  %s2 = inlined_call_operand.vmem [shape: f32[1,64], index: 2, kind: input, shape index: {}]
  %s3 = inlined_call_operand.hbm [shape: f32[8,64], index: 3, kind: output, shape index: {}]
  %s4 = sld [smem:[#allocation0]]
  $region38: #{_linear_forward_impl.1} parent=0
    _
  %s6 = ssub.s32 1, %s4
  %s7 = scalar_select 0, %s6, %s4
  $region1: #{_linear_forward_impl.1} parent=0
    #allocation2 [shape = 'u8[4096]{0}', space=vmem, size = 0x1000, scoped, tag = 'input window, operand 0, single buffered']
    #allocation3 [shape = 's32[1]{0}', space=sflag, size = 0x4, scoped, tag = 'scoped memory for _linear_forward_impl.1']
    #allocation4 [shape = 's32[1]{0}', space=sflag, size = 0x4, scoped, tag = 'scoped memory for _linear_forward_impl.1']
    #allocation5 [shape = 'u8[16384]{0}', space=vmem, size = 0x4000, scoped, tag = 'input window, operand 1, single buffered']
    #allocation6 [shape = 's32[1]{0}', space=sflag, size = 0x4, scoped, tag = 'scoped memory for _linear_forward_impl.1']
    #allocation7 [shape = 'u8[4096]{0}', space=vmem, size = 0x1000, scoped, tag = 'output window, operand 0, single buffered']
    %8 = vsyncpa [#allocation3], 0
    %9 = vsyncpa [#allocation6], 0
    %10 = vsyncpa [#allocation4], 0
    // Predicated region
    $region2: #{_linear_forward_impl.1} parent=1 // pred_check
      _
    $region3: #{_linear_forward_impl.1} parent=1 // pred_check_branch
      %12 = sbr.rel (0) target = $region5
    $region4: #{_linear_forward_impl.1} parent=1 // pred_region
      %s14 = ssub.s32 128, 128
      %15 = vsyncadd [#allocation3], %s14
      %s17 = sshll.u32 [#allocation2], 4
      %s18 = int_to_ptr.vmem [resolvable:$true] %s17
      %20 = dma.hbm_to_vmem [thread:$0]  %s0, 128, %s18, [#allocation3]
    $region5: #{_linear_forward_impl.1} parent=1 // pred_fallthru
      _
    // Predicated region
    $region6: #{_linear_forward_impl.1} parent=1 // pred_check
      _
    $region7: #{_linear_forward_impl.1} parent=1 // pred_check_branch
      %22 = sbr.rel (0) target = $region9
    $region8: #{_linear_forward_impl.1} parent=1 // pred_region
      %s24 = ssub.s32 512, 512
      %25 = vsyncadd [#allocation6], %s24
      %s26 = sshll.u32 [#allocation5], 4
      %s27 = int_to_ptr.vmem [resolvable:$true] %s26
      %32 = dma.hbm_to_vmem [thread:$0]  %s1, 512, %s27, [#allocation6], 128, 128, 8
    $region9: #{_linear_forward_impl.1} parent=1 // pred_fallthru
      _
    // Predicated region
    $region10: #{_linear_forward_impl.1} parent=1 // pred_check
      _
    $region11: #{_linear_forward_impl.1} parent=1 // pred_check_branch
      %34 = sbr.rel (0) target = $region13
    $region12: #{_linear_forward_impl.1} parent=1 // pred_region
      _
    $region13: #{_linear_forward_impl.1} parent=1 // pred_fallthru
      _
    // Predicated region
    $region14: #{_linear_forward_impl.1} parent=1 // pred_check
      _
    $region15: #{_linear_forward_impl.1} parent=1 // pred_check_branch
      %36 = sbr.rel (0) target = $region17
    $region16: #{_linear_forward_impl.1} parent=1 // pred_region
      %37 = dma.done [#allocation3], 128
    $region17: #{_linear_forward_impl.1} parent=1 // pred_fallthru
      _
    // Predicated region
    $region18: #{_linear_forward_impl.1} parent=1 // pred_check
      _
    $region19: #{_linear_forward_impl.1} parent=1 // pred_check_branch
      %39 = sbr.rel (0) target = $region21
    $region20: #{_linear_forward_impl.1} parent=1 // pred_region
      %40 = dma.done [#allocation6], 512
    $region21: #{_linear_forward_impl.1} parent=1 // pred_fallthru
      _
    %p41 = scmp.eq.s32.totalorder 0, 0
    // Predicated region
    $region22: #{_linear_forward_impl.1} parent=1 // pred_check
      %p42 = pneg %p41
    $region23: #{_linear_forward_impl.1} parent=1 // pred_check_branch
      %44 = sbr.rel (%p42) target = $region25
    $region24: #{_linear_forward_impl.1} parent=1 // pred_region
      %vm45 = vcmask 523264
      %46 = vst.msk [vmem:[#allocation7] sm:$0xff] %vm45, 0.0
    $region25: #{_linear_forward_impl.1} parent=1 // pred_fallthru
      _
    %v47 = vld [vmem:[#allocation7] sm:$0xff]
    %v48 = vld [vmem:[#allocation2] sm:$0xff]
    %v49 = vld [vmem:[#allocation5] sm:$0xff]
    %v50 = vld [vmem:[#allocation5 + $0x8] sm:$0xff]
    %v51 = vld [vmem:[#allocation5 + $0x10] sm:$0xff]
    %v52 = vld [vmem:[#allocation5 + $0x18] sm:$0xff]
    %vm53 = vcmask 261120
    %v55 = vsel %vm53, %v48, 0
    %57 = vmatprep.subr.mxu0 0.0
    %58 = vmatpush1.msra.mxu0 %v49
    %59 = vmatprep.subr.mxu0 0.0
    %60 = vmatpush1.msra.mxu0 %v50
    %61 = vmatprep.subr.mxu0 0.0
    %62 = vmatpush1.msra.mxu0 %v51
    %63 = vmatprep.subr.mxu0 0.0
    %64 = vmatpush1.msra.mxu0 %v52
    %65 = vmatprep.subr.mxu0 0.0
    %66 = vmatpush1.msra.mxu0 0.0
    %67 = vmatprep.subr.mxu0 0.0
    %68 = vmatpush1.msra.mxu0 0.0
    %69 = vmatprep.subr.mxu0 0.0
    %70 = vmatpush1.msra.mxu0 0.0
    %71 = vmatprep.subr.mxu0 0.0
    %72 = vmatpush1.msra.mxu0 0.0
    %73 = vmatprep.subr.mxu0 0.0
    %74 = vmatpush1.msra.mxu0 0.0
    %75 = vmatprep.subr.mxu0 0.0
    %76 = vmatpush1.msra.mxu0 0.0
    %77 = vmatprep.subr.mxu0 0.0
    %78 = vmatpush1.msra.mxu0 0.0
    %79 = vmatprep.subr.mxu0 0.0
    %80 = vmatpush1.msra.mxu0 0.0
    %81 = vmatprep.subr.mxu0 0.0
    %82 = vmatpush1.msra.mxu0 0.0
    %83 = vmatprep.subr.mxu0 0.0
    %84 = vmatpush1.msra.mxu0 0.0
    %85 = vmatprep.subr.mxu0 0.0
    %86 = vmatpush1.msra.mxu0 0.0
    %87 = vmatprep.subr.mxu0 0.0
    %88 = vmatpush1.msra.mxu0 0.0
    %89 = vmatprep.subr.mxu0 0.0
    %90 = vmatpush1.msra.mxu0 0.0
    %91 = vmatprep.subr.mxu0 0.0
    %92 = vmatpush1.msra.mxu0 0.0
    %93 = vmatprep.subr.mxu0 0.0
    %94 = vmatpush1.msra.mxu0 0.0
    %95 = vmatprep.subr.mxu0 0.0
    %96 = vmatpush1.msra.mxu0 0.0
    %97 = vmatprep.subr.mxu0 0.0
    %98 = vmatpush1.msra.mxu0 0.0
    %99 = vmatprep.subr.mxu0 0.0
    %100 = vmatpush1.msra.mxu0 0.0
    %101 = vmatprep.subr.mxu0 0.0
    %102 = vmatpush1.msra.mxu0 0.0
    %103 = vmatprep.subr.mxu0 0.0
    %104 = vmatpush1.msra.mxu0 0.0
    %105 = vmatprep.subr.mxu0 0.0
    %106 = vmatpush1.msra.mxu0 0.0
    %107 = vmatprep.subr.mxu0 0.0
    %108 = vmatpush1.msra.mxu0 0.0
    %109 = vmatprep.subr.mxu0 0.0
    %110 = vmatpush1.msra.mxu0 0.0
    %111 = vmatprep.subr.mxu0 0.0
    %112 = vmatpush1.msra.mxu0 0.0
    %113 = vmatprep.subr.mxu0 0.0
    %114 = vmatpush1.msra.mxu0 0.0
    %115 = vmatprep.subr.mxu0 0.0
    %116 = vmatpush1.msra.mxu0 0.0
    %117 = vmatprep.subr.mxu0 0.0
    %118 = vmatpush1.msra.mxu0 0.0
    %119 = vmatprep.subr.mxu0 0.0
    %120 = vmatpush1.msra.mxu0 0.0
    %121 = vmatprep.mubr.f32.mxu0 0.0
    %122 = vmatmul.mubr.f32.gmra.mrb[0].mxu0 %v55
    %v123 = vpop.f32.mrb[0].mxu0
    %v124 = vadd.f32 0.0, %v123
    %v125 = vpop.f32.mrb[0].mxu0
    %126 = vdwg.mxu0
    %v127 = vadd.f32 %v47, %v124
    %vm128 = vcmask 523264
    %129 = vst.msk [vmem:[#allocation7] sm:$0xff] %vm128, %v127
    // Predicated region
    $region26: #{_linear_forward_impl.1} parent=1 // pred_check
      %p130 = pneg %p41
    $region27: #{_linear_forward_impl.1} parent=1 // pred_check_branch
      %132 = sbr.rel (%p130) target = $region29
    $region28: #{_linear_forward_impl.1} parent=1 // pred_region
      %v133 = vld [vmem:[#allocation7] sm:$0xff]
      %v134 = vld [vmem:[%s2] sm:$0x1]
      %v136 = vlaneseq
      %v137 = vshrl.u32 %v136, 7
      %v138 = vsub.s32 0, %v137
      %v139 = vrot.slane %v134, %v138
      %v141 = vadd.f32 %v133, %v139
      %142 = vst.msk [vmem:[#allocation7] sm:$0xff] %vm128, %v141
    $region29: #{_linear_forward_impl.1} parent=1 // pred_fallthru
      _
    // Predicated region
    $region30: #{_linear_forward_impl.1} parent=1 // pred_check
      _
    $region31: #{_linear_forward_impl.1} parent=1 // pred_check_branch
      %144 = sbr.rel (0) target = $region33
    $region32: #{_linear_forward_impl.1} parent=1 // pred_region
      %s146 = ssub.s32 128, 128
      %147 = vsyncadd [#allocation4], %s146
      %s149 = sshll.u32 [#allocation7], 4
      %s150 = int_to_ptr.vmem [resolvable:$true] %s149
      %152 = dma.vmem_to_hbm [thread:$0]  %s150, 128, %s3, [#allocation4]
    $region33: #{_linear_forward_impl.1} parent=1 // pred_fallthru
      _
    // Predicated region
    $region34: #{_linear_forward_impl.1} parent=1 // pred_check
      _
    $region35: #{_linear_forward_impl.1} parent=1 // pred_check_branch
      %154 = sbr.rel (0) target = $region37
    $region36: #{_linear_forward_impl.1} parent=1 // pred_region
      %155 = dma.done [#allocation4], 128
    $region37: #{_linear_forward_impl.1} parent=1 // pred_fallthru
      _
    %156 = vsyncpa [#allocation3], 1
    %157 = vsyncpa [#allocation6], 1
    %158 = vsyncpa [#allocation4], 1

</llo_original>
